<compile_context>
chip_gen: v7x
topology: tpu7x:2x2x1
jax: 0.10.0
libtpu: 0.0.40
codegen_flags: <defaults>
</compile_context>

<pallas_src>
import functools

import jax
import jax.numpy as jnp
from jax.experimental import pallas as pl
from jax.experimental.pallas import tpu as pltpu


def scale_norm_ref(x, g, *, eps=1e-4):
    """Pure-JAX reference matching the PyTorch forward."""
    D = x.shape[-1]
    scale = float(D) ** (-0.5)
    norm = jnp.linalg.norm(x.astype(jnp.float32), axis=-1, keepdims=True) * scale
    norm = jnp.maximum(norm, eps)
    return (x.astype(jnp.float32) / norm * jnp.asarray(g, jnp.float32).reshape(())
            ).astype(x.dtype)


def _scalenorm_kernel(x_ref, g_ref, o_ref, *, scale, eps, groups, dim):
    # x_ref: (tile_rows, groups*dim) block in VMEM; g_ref: (1,) f32 in SMEM.
    rows, width = x_ref.shape
    g = g_ref[0].astype(jnp.float32)

    # Pass 1: squared sums.  The f32 upcast is NOT kept live into pass 2 (we
    # re-read x_ref below), keeping peak VMEM scratch to ~1-2 f32 tiles.
    xf = x_ref[...].astype(jnp.float32)                  # (rows, width)
    sq = xf * xf

    if groups == 1:
        ssum = jnp.sum(sq, axis=-1, keepdims=True)                      # (rows, 1)
        inv_full = g / jnp.maximum(jnp.sqrt(ssum) * scale, eps)         # (rows, 1)
    else:
        # Lane-packed layout: each 128-lane row holds `groups` original rows of
        # length `dim`.  Segmented reduce + masked scatter-back use the XLU/VPU
        # (idle here); HBM I/O stays 128-lane dense.
        lane = jax.lax.broadcasted_iota(jnp.int32, (rows, width), 1)
        inv_full = jnp.zeros((rows, width), jnp.float32)
        for j in range(groups):                          # groups <= 16, static unroll
            s = jnp.sum(sq[:, j * dim:(j + 1) * dim], axis=-1, keepdims=True)
            inv_j = g / jnp.maximum(jnp.sqrt(s) * scale, eps)           # (rows, 1)
            in_group = (lane >= j * dim) & (lane < (j + 1) * dim)
            inv_full = jnp.where(in_group, inv_j, inv_full)

    # Pass 2: re-read x from VMEM (vld slots have huge headroom) instead of
    # holding the pass-1 f32 copy across the reduction.
    x2 = x_ref[...].astype(jnp.float32)
    o_ref[...] = (x2 * inv_full).astype(o_ref.dtype)


def _vmem_capacity_bytes():
    """Best-effort physical VMEM query; conservative (v7x-sized) default."""
    try:
        cap = getattr(pltpu.get_tpu_info(), "vmem_capacity_bytes", None)
        if cap:
            return int(cap)
    except Exception:
        pass
    return 64 * 1024 * 1024


def _row_axis_semantics():
    """Engage both v7x TensorCores on the row axis; portable elsewhere."""
    try:
        kind = jax.devices()[0].device_kind.lower()
    except Exception:
        kind = ""
    if "v7" in kind:
        return (pltpu.CORE_PARALLEL,)
    return ("parallel",)


def _choose_tile_rows(num_rows, row_bytes, target_tile_bytes, max_rows=32768):
    """Largest row tile (multiple of 8) whose bytes fit the per-buffer budget."""
    rows = int(target_tile_bytes // max(1, row_bytes))
    rows = max(8, min(max_rows, rows))
    rows -= rows % 8                       # sublane (8) alignment
    rows = max(8, rows)
    rows_needed = ((num_rows + 7) // 8) * 8
    return min(rows, rows_needed)


def scale_norm(x, g, *, eps=1e-4):
    """Pallas ScaleNorm. x: (..., D), g: scalar parameter (shape (1,))."""
    orig_shape = x.shape
    D = int(orig_shape[-1])
    scale = float(D) ** (-0.5)

    x2d = x.reshape(-1, D)
    R = x2d.shape[0]
    itemsize = x2d.dtype.itemsize

    # VMEM-capacity-gated tile budget: big tiles on 128 MiB chips (v5e/v6e),
    # conservative on v7x's 64 MiB.  Keep default Buffered(2) pipelining.
    cap = _vmem_capacity_bytes()
    if cap >= 100 * 1024 * 1024:          # v5e / v6e (128 MiB physical VMEM)
        target_tile_bytes = 8 * 1024 * 1024
        vmem_limit = 80 * 1024 * 1024
    else:                                 # v7x (64 MiB) or unknown
        target_tile_bytes = 4 * 1024 * 1024
        vmem_limit = 40 * 1024 * 1024

    # Lane-dense packing: fold groups = 128 // D original rows into one
    # 128-lane packed row when D < 128 and D | 128 (and D >= 8).
    if D < 128 and 128 % D == 0 and D >= 8:
        groups = 128 // D
    else:
        groups = 1
    Dp = groups * D
    row_bytes = Dp * itemsize

    # TODO(synk): rows so wide that even an 8-row tile overflows the VMEM
    # budget should get a D-chunked two-pass Pallas path (sq-sum accumulator
    # in scratch, init/finalize via pl.when); fall back to plain XLA for now.
    if 8 * row_bytes > vmem_limit // 8:
        return scale_norm_ref(x, g, eps=eps)

    if groups > 1:
        rows_padded = ((R + groups - 1) // groups) * groups
        if rows_padded != R:
            # Zero padding: padded sub-rows get norm 0 -> clamped to eps -> 0,
            # and are sliced away below.
            x2d = jnp.pad(x2d, ((0, rows_padded - R), (0, 0)))
        xp = x2d.reshape(rows_padded // groups, Dp)
    else:
        xp = x2d
    Rp = xp.shape[0]

    tile_rows = _choose_tile_rows(Rp, row_bytes, target_tile_bytes)
    # cdiv grid: last block may be partial; OOB writes are dropped and the
    # reduction is per packed row/group, so garbage rows never contaminate
    # valid ones.
    grid = (pl.cdiv(Rp, tile_rows),)

    g1d = jnp.reshape(jnp.asarray(g), (1,)).astype(jnp.float32)
    kernel = functools.partial(_scalenorm_kernel, scale=scale, eps=eps,
                               groups=groups, dim=D)

    def run(dim_sem):
        return pl.pallas_call(
            kernel,
            out_shape=jax.ShapeDtypeStruct((Rp, Dp), x.dtype),
            grid_spec=pltpu.PrefetchScalarGridSpec(
                num_scalar_prefetch=0,
                grid=grid,
                in_specs=[
                    pl.BlockSpec((tile_rows, Dp), lambda i: (i, 0)),
                    pl.BlockSpec(memory_space=pltpu.MemorySpace.SMEM),
                ],
                out_specs=pl.BlockSpec((tile_rows, Dp), lambda i: (i, 0)),
            ),
            compiler_params=pltpu.CompilerParams(
                dimension_semantics=dim_sem,
                vmem_limit_bytes=vmem_limit,
            ),
        )(xp, g1d)

    sem = _row_axis_semantics()
    if sem == ("parallel",):
        out2d = run(sem)
    else:
        try:
            out2d = run(sem)
        except Exception:
            # CORE_PARALLEL is best-effort (use both v7x TCs); fall back to the
            # portable path if this Mosaic build rejects it for this grid.
            out2d = run(("parallel",))

    if groups > 1:
        out2d = out2d.reshape(-1, D)[:R]
    return out2d.reshape(orig_shape)


if __name__ == "__main__":
    key = jax.random.PRNGKey(0)
    k1, k2 = jax.random.split(key)

    # Parameter init matching nn.Parameter(torch.ones(1))
    g = jnp.ones((1,), dtype=jnp.float32)

    # Case 1: (batch, seq, hidden) as implied by the module; D=32 exercises
    # the lane-dense packed path (groups = 4).
    B, S, D = 2, 8, 32
    x = jax.random.normal(k1, (B, S, D), dtype=jnp.float32)
    out = jax.block_until_ready(scale_norm(x, g, eps=1e-4))
    ref = scale_norm_ref(x, g, eps=1e-4)
    assert out.shape == x.shape
    assert jnp.allclose(out, ref, atol=1e-5, rtol=1e-5), "f32 mismatch vs reference"

    # Case 2: ragged row count + bf16 + D=128 exercises the unpacked /
    # cdiv-grid / dtype path.
    xb = jax.random.normal(k2, (3, 7, 128), dtype=jnp.float32).astype(jnp.bfloat16)
    outb = jax.block_until_ready(scale_norm(xb, g, eps=1e-4))
    refb = scale_norm_ref(xb, g, eps=1e-4)
    assert outb.shape == xb.shape
    assert jnp.allclose(outb.astype(jnp.float32), refb.astype(jnp.float32),
                        atol=2e-2, rtol=2e-2), "bf16 mismatch vs reference"

    print("KERNEL_OK")
</pallas_src>

<mosaic_0001>
module attributes {stable_mosaic.version = 11 : i64} {
  func.func @_scalenorm_kernel(%arg0: i32, %arg1: memref<8x128xf32, #tpu.memory_space<vmem>>, %arg2: memref<1xf32, #tpu.memory_space<smem>>, %arg3: memref<8x128xf32, #tpu.memory_space<vmem>>) attributes {dimension_semantics = [#tpu.dimension_semantics<parallel>], iteration_bounds = array<i64: 1>, scalar_prefetch = 0 : i64, scratch_operands = 0 : i64, tpu.core_type = #tpu.core_type<tc>, window_params = [{transform_indices = @transform_0, window_bounds = array<i64: 8, 128>}, {transform_indices = @transform_1, window_bounds = array<i64: 1>}, {transform_indices = @transform_2, window_bounds = array<i64: 8, 128>}]} {
    %c0 = arith.constant 0 : index
    %0 = memref.load %arg2[%c0] : memref<1xf32, #tpu.memory_space<smem>>
    %c0_0 = arith.constant 0 : index
    %c0_1 = arith.constant 0 : index
    %1 = vector.load %arg1[%c0_0, %c0_1] : memref<8x128xf32, #tpu.memory_space<vmem>>, vector<8x128xf32>
    %2 = arith.mulf %1, %1 : vector<8x128xf32>
    %3 = tpu.iota {dimensions = array<i32: 1>} : vector<8x128xi32>
    %cst = arith.constant 0.000000e+00 : f32
    %4 = vector.broadcast %cst : f32 to vector<8x128xf32>
    %5 = vector.extract_strided_slice %2 {offsets = [0, 0], sizes = [8, 32], strides = [1, 1]} : vector<8x128xf32> to vector<8x32xf32>
    %cst_2 = arith.constant dense<0.000000e+00> : vector<8xf32>
    %6 = vector.multi_reduction <add>, %5, %cst_2 [1] : vector<8x32xf32> to vector<8xf32>
    %7 = vector.shape_cast %6 : vector<8xf32> to vector<8x1xf32>
    %8 = math.sqrt %7 : vector<8x1xf32>
    %cst_3 = arith.constant 0.176776692 : f32
    %9 = vector.broadcast %cst_3 : f32 to vector<8x1xf32>
    %10 = arith.mulf %8, %9 : vector<8x1xf32>
    %cst_4 = arith.constant 9.99999974E-5 : f32
    %11 = vector.broadcast %cst_4 : f32 to vector<8x1xf32>
    %12 = arith.maximumf %10, %11 : vector<8x1xf32>
    %13 = vector.broadcast %0 : f32 to vector<8x1xf32>
    %14 = arith.divf %13, %12 : vector<8x1xf32>
    %c0_i32 = arith.constant 0 : i32
    %15 = vector.broadcast %c0_i32 : i32 to vector<8x128xi32>
    %16 = arith.cmpi sge, %3, %15 : vector<8x128xi32>
    %c32_i32 = arith.constant 32 : i32
    %17 = vector.broadcast %c32_i32 : i32 to vector<8x128xi32>
    %18 = arith.cmpi slt, %3, %17 : vector<8x128xi32>
    %19 = arith.andi %16, %18 : vector<8x128xi1>
    %20 = vector.shape_cast %14 : vector<8x1xf32> to vector<8x1xf32>
    %21 = vector.broadcast %20 : vector<8x1xf32> to vector<8x128xf32>
    %22 = arith.select %19, %21, %4 : vector<8x128xi1>, vector<8x128xf32>
    %23 = vector.extract_strided_slice %2 {offsets = [0, 32], sizes = [8, 32], strides = [1, 1]} : vector<8x128xf32> to vector<8x32xf32>
    %cst_5 = arith.constant dense<0.000000e+00> : vector<8xf32>
    %24 = vector.multi_reduction <add>, %23, %cst_5 [1] : vector<8x32xf32> to vector<8xf32>
    %25 = vector.shape_cast %24 : vector<8xf32> to vector<8x1xf32>
    %26 = math.sqrt %25 : vector<8x1xf32>
    %cst_6 = arith.constant 0.176776692 : f32
    %27 = vector.broadcast %cst_6 : f32 to vector<8x1xf32>
    %28 = arith.mulf %26, %27 : vector<8x1xf32>
    %cst_7 = arith.constant 9.99999974E-5 : f32
    %29 = vector.broadcast %cst_7 : f32 to vector<8x1xf32>
    %30 = arith.maximumf %28, %29 : vector<8x1xf32>
    %31 = vector.broadcast %0 : f32 to vector<8x1xf32>
    %32 = arith.divf %31, %30 : vector<8x1xf32>
    %c32_i32_8 = arith.constant 32 : i32
    %33 = vector.broadcast %c32_i32_8 : i32 to vector<8x128xi32>
    %34 = arith.cmpi sge, %3, %33 : vector<8x128xi32>
    %c64_i32 = arith.constant 64 : i32
    %35 = vector.broadcast %c64_i32 : i32 to vector<8x128xi32>
    %36 = arith.cmpi slt, %3, %35 : vector<8x128xi32>
    %37 = arith.andi %34, %36 : vector<8x128xi1>
    %38 = vector.shape_cast %32 : vector<8x1xf32> to vector<8x1xf32>
    %39 = vector.broadcast %38 : vector<8x1xf32> to vector<8x128xf32>
    %40 = arith.select %37, %39, %22 : vector<8x128xi1>, vector<8x128xf32>
    %41 = vector.extract_strided_slice %2 {offsets = [0, 64], sizes = [8, 32], strides = [1, 1]} : vector<8x128xf32> to vector<8x32xf32>
    %cst_9 = arith.constant dense<0.000000e+00> : vector<8xf32>
    %42 = vector.multi_reduction <add>, %41, %cst_9 [1] : vector<8x32xf32> to vector<8xf32>
    %43 = vector.shape_cast %42 : vector<8xf32> to vector<8x1xf32>
    %44 = math.sqrt %43 : vector<8x1xf32>
    %cst_10 = arith.constant 0.176776692 : f32
    %45 = vector.broadcast %cst_10 : f32 to vector<8x1xf32>
    %46 = arith.mulf %44, %45 : vector<8x1xf32>
    %cst_11 = arith.constant 9.99999974E-5 : f32
    %47 = vector.broadcast %cst_11 : f32 to vector<8x1xf32>
    %48 = arith.maximumf %46, %47 : vector<8x1xf32>
    %49 = vector.broadcast %0 : f32 to vector<8x1xf32>
    %50 = arith.divf %49, %48 : vector<8x1xf32>
    %c64_i32_12 = arith.constant 64 : i32
    %51 = vector.broadcast %c64_i32_12 : i32 to vector<8x128xi32>
    %52 = arith.cmpi sge, %3, %51 : vector<8x128xi32>
    %c96_i32 = arith.constant 96 : i32
    %53 = vector.broadcast %c96_i32 : i32 to vector<8x128xi32>
    %54 = arith.cmpi slt, %3, %53 : vector<8x128xi32>
    %55 = arith.andi %52, %54 : vector<8x128xi1>
    %56 = vector.shape_cast %50 : vector<8x1xf32> to vector<8x1xf32>
    %57 = vector.broadcast %56 : vector<8x1xf32> to vector<8x128xf32>
    %58 = arith.select %55, %57, %40 : vector<8x128xi1>, vector<8x128xf32>
    %59 = vector.extract_strided_slice %2 {offsets = [0, 96], sizes = [8, 32], strides = [1, 1]} : vector<8x128xf32> to vector<8x32xf32>
    %cst_13 = arith.constant dense<0.000000e+00> : vector<8xf32>
    %60 = vector.multi_reduction <add>, %59, %cst_13 [1] : vector<8x32xf32> to vector<8xf32>
    %61 = vector.shape_cast %60 : vector<8xf32> to vector<8x1xf32>
    %62 = math.sqrt %61 : vector<8x1xf32>
    %cst_14 = arith.constant 0.176776692 : f32
    %63 = vector.broadcast %cst_14 : f32 to vector<8x1xf32>
    %64 = arith.mulf %62, %63 : vector<8x1xf32>
    %cst_15 = arith.constant 9.99999974E-5 : f32
    %65 = vector.broadcast %cst_15 : f32 to vector<8x1xf32>
    %66 = arith.maximumf %64, %65 : vector<8x1xf32>
    %67 = vector.broadcast %0 : f32 to vector<8x1xf32>
    %68 = arith.divf %67, %66 : vector<8x1xf32>
    %c96_i32_16 = arith.constant 96 : i32
    %69 = vector.broadcast %c96_i32_16 : i32 to vector<8x128xi32>
    %70 = arith.cmpi sge, %3, %69 : vector<8x128xi32>
    %c128_i32 = arith.constant 128 : i32
    %71 = vector.broadcast %c128_i32 : i32 to vector<8x128xi32>
    %72 = arith.cmpi slt, %3, %71 : vector<8x128xi32>
    %73 = arith.andi %70, %72 : vector<8x128xi1>
    %74 = vector.shape_cast %68 : vector<8x1xf32> to vector<8x1xf32>
    %75 = vector.broadcast %74 : vector<8x1xf32> to vector<8x128xf32>
    %76 = arith.select %73, %75, %58 : vector<8x128xi1>, vector<8x128xf32>
    %c0_17 = arith.constant 0 : index
    %c0_18 = arith.constant 0 : index
    %77 = vector.load %arg1[%c0_17, %c0_18] : memref<8x128xf32, #tpu.memory_space<vmem>>, vector<8x128xf32>
    %78 = arith.mulf %77, %76 : vector<8x128xf32>
    %c0_19 = arith.constant 0 : index
    %c0_20 = arith.constant 0 : index
    %79 = vector.load %arg3[%c0_19, %c0_20] : memref<8x128xf32, #tpu.memory_space<vmem>>, vector<8x128xf32>
    tpu.vector_store %arg3[%c0_19, %c0_20], %78 {strides = array<i32>} : memref<8x128xf32, #tpu.memory_space<vmem>>, vector<8x128xf32>,
    return
  }
  func.func @transform_0(%arg0: i32) -> (i32, i32) {
    %c0_i32 = arith.constant 0 : i32
    %c0_i32_0 = arith.constant 0 : i32
    return %arg0, %c0_i32 : i32, i32
  }
  func.func @transform_1(%arg0: i32) -> i32 {
    %c0_i32 = arith.constant 0 : i32
    %c0_i32_0 = arith.constant 0 : i32
    return %c0_i32 : i32
  }
  func.func @transform_2(%arg0: i32) -> (i32, i32) {
    %c0_i32 = arith.constant 0 : i32
    %c0_i32_0 = arith.constant 0 : i32
    return %arg0, %c0_i32 : i32, i32
  }
}

</mosaic_0001>

<llo_original>
// kernel: tpu_custom_call.1
$region0: #{tpu_custom_call.1}
  #allocation0 [shape = 'u32[]', space=smem, size = 0x4, offset = 0x4, fixed_abs, tag = 'smem constant byte address 0x4 - core index']
  #allocation1 [shape = 'u32[144,128]{1,0:T(1,128)}', space=vmem, size = 0x12000, scoped, tag = 'internal scratch']
  #allocation2 [shape = 'f32[1]{0:T(128)S(6)}', space=smem, size = 0x200, scoped, tag = 'scoped memory for tpu_custom_call.1']
  %s0 = inlined_call_operand.hbm [shape: f32[4,128], index: 0, kind: input, shape index: {}]
  %s1 = inlined_call_operand.<no memory space> [shape: f32[1], index: 1, kind: input, shape index: {}]
  %s2 = inlined_call_operand.hbm [shape: f32[4,128], index: 2, kind: output, shape index: {}]
  %s3 = sld [smem:[#allocation0]]
  $region22: #{tpu_custom_call.1} parent=0
    _
  %s5 = ssub.s32 1, %s3
  %s6 = scalar_select 0, %s5, %s3
  %7 = sst [smem:[#allocation2]] %s1
  $region1: #{tpu_custom_call.1} parent=0
    #allocation3 [shape = 'u8[4096]{0}', space=vmem, size = 0x1000, scoped, tag = 'input window, operand 0, single buffered']
    #allocation4 [shape = 's32[1]{0}', space=sflag, size = 0x4, scoped, tag = 'scoped memory for tpu_custom_call.1']
    #allocation5 [shape = 's32[1]{0}', space=sflag, size = 0x4, scoped, tag = 'scoped memory for tpu_custom_call.1']
    #allocation6 [shape = 'u8[4096]{0}', space=vmem, size = 0x1000, scoped, tag = 'output window, operand 0, single buffered']
    %8 = vsyncpa [#allocation4], 0
    %9 = vsyncpa [#allocation5], 0
    // Predicated region
    $region2: #{tpu_custom_call.1} parent=1 // pred_check
      _
    $region3: #{tpu_custom_call.1} parent=1 // pred_check_branch
      %11 = sbr.rel (0) target = $region5
    $region4: #{tpu_custom_call.1} parent=1 // pred_region
      %s13 = ssub.s32 128, 64
      %14 = vsyncadd [#allocation4], %s13
      %s15 = sshll.u32 [#allocation3], 4
      %s16 = int_to_ptr.vmem [resolvable:$true] %s15
      %21 = dma.hbm_to_vmem [thread:$0]  %s0, 64, %s16, [#allocation4], 64, 64, 4
    $region5: #{tpu_custom_call.1} parent=1 // pred_fallthru
      _
    // Predicated region
    $region6: #{tpu_custom_call.1} parent=1 // pred_check
      _
    $region7: #{tpu_custom_call.1} parent=1 // pred_check_branch
      %23 = sbr.rel (0) target = $region9
    $region8: #{tpu_custom_call.1} parent=1 // pred_region
      _
    $region9: #{tpu_custom_call.1} parent=1 // pred_fallthru
      _
    // Predicated region
    $region10: #{tpu_custom_call.1} parent=1 // pred_check
      _
    $region11: #{tpu_custom_call.1} parent=1 // pred_check_branch
      %25 = sbr.rel (0) target = $region13
    $region12: #{tpu_custom_call.1} parent=1 // pred_region
      %26 = dma.done [#allocation4], 128
    $region13: #{tpu_custom_call.1} parent=1 // pred_fallthru
      _
    %s27 = sld [smem:[#allocation2]]
    %v28 = vld [vmem:[#allocation3] sm:$0xff]
    %v29 = vmul.f32 %v28, %v28
    %v30 = vlaneseq
    %v31 = vand.u32 %v30, 127
    %vm32 = vcmask 261120
    %v33 = vsel %vm32, %v29, 0.0
    %34 = vadd.xlane.f32.xlu0 %v33
    %v35 = vpop.xlane.xlu0 %34
    %v36 = vrsqrt.pop %v35
    %v37 = vmul.f32 %v35, %v36
    %vm38 = vcmp.eq.f32.partialorder %v35, inf
    %v39 = vsel %vm38, %v35, %v37
    %vm40 = vcmp.eq.f32.partialorder %v35, 0.0
    %v41 = vand.u32 %v35, 2147483648
    %v42 = vsel %vm40, %v41, %v39
    %v43 = vmul.f32 %v42, 0.17677669
    %v44 = vmax.f32 %v43, 0.0001
    %v45 = vstv %s27
    %v46 = vrcp.pop %v44
    %v47 = vmul.f32 %v45, %v46
    %vm48 = vcmp.ge.s32.totalorder %v31, 0
    %vm49 = vcmp.lt.s32.totalorder %v31, 32
    %vm50 = vmand %vm48, %vm49
    %v51 = vsel %vm50, %v47, 0.0
    %53 = vrot.lane.b32.xlu0 %v29, 96
    %v54 = vpop.permute.xlu0 %53
    %v56 = vsel %vm32, %v54, 0.0
    %57 = vadd.xlane.f32.xlu0 %v56
    %v58 = vpop.xlane.xlu0 %57
    %v59 = vrsqrt.pop %v58
    %v60 = vmul.f32 %v58, %v59
    %vm61 = vcmp.eq.f32.partialorder %v58, inf
    %v62 = vsel %vm61, %v58, %v60
    %vm63 = vcmp.eq.f32.partialorder %v58, 0.0
    %v64 = vand.u32 %v58, 2147483648
    %v65 = vsel %vm63, %v64, %v62
    %v66 = vmul.f32 %v65, 0.17677669
    %v67 = vmax.f32 %v66, 0.0001
    %v68 = vrcp.pop %v67
    %v69 = vmul.f32 %v45, %v68
    %vm70 = vcmp.ge.s32.totalorder %v31, 32
    %vm71 = vcmp.lt.s32.totalorder %v31, 64
    %vm72 = vmand %vm70, %vm71
    %v73 = vsel %vm72, %v69, %v51
    %74 = vrot.lane.b32.xlu0 %v29, 64
    %v75 = vpop.permute.xlu0 %74
    %v77 = vsel %vm32, %v75, 0.0
    %78 = vadd.xlane.f32.xlu0 %v77
    %v79 = vpop.xlane.xlu0 %78
    %v80 = vrsqrt.pop %v79
    %v81 = vmul.f32 %v79, %v80
    %vm82 = vcmp.eq.f32.partialorder %v79, inf
    %v83 = vsel %vm82, %v79, %v81
    %vm84 = vcmp.eq.f32.partialorder %v79, 0.0
    %v85 = vand.u32 %v79, 2147483648
    %v86 = vsel %vm84, %v85, %v83
    %v87 = vmul.f32 %v86, 0.17677669
    %v88 = vmax.f32 %v87, 0.0001
    %v89 = vrcp.pop %v88
    %v90 = vmul.f32 %v45, %v89
    %vm91 = vcmp.ge.s32.totalorder %v31, 64
    %vm92 = vcmp.lt.s32.totalorder %v31, 96
    %vm93 = vmand %vm91, %vm92
    %v94 = vsel %vm93, %v90, %v73
    %95 = vrot.lane.b32.xlu0 %v29, 32
    %v96 = vpop.permute.xlu0 %95
    %v98 = vsel %vm32, %v96, 0.0
    %99 = vadd.xlane.f32.xlu0 %v98
    %v100 = vpop.xlane.xlu0 %99
    %v101 = vrsqrt.pop %v100
    %v102 = vmul.f32 %v100, %v101
    %vm103 = vcmp.eq.f32.partialorder %v100, inf
    %v104 = vsel %vm103, %v100, %v102
    %vm105 = vcmp.eq.f32.partialorder %v100, 0.0
    %v106 = vand.u32 %v100, 2147483648
    %v107 = vsel %vm105, %v106, %v104
    %v108 = vmul.f32 %v107, 0.17677669
    %v109 = vmax.f32 %v108, 0.0001
    %v110 = vrcp.pop %v109
    %v111 = vmul.f32 %v45, %v110
    %vm112 = vcmp.ge.s32.totalorder %v31, 96
    %vm113 = vcmp.lt.s32.totalorder %v31, 128
    %vm114 = vmand %vm112, %vm113
    %v115 = vsel %vm114, %v111, %v94
    %v116 = vmul.f32 %v28, %v115
    %117 = vst [vmem:[#allocation6] sm:$0xff] %v116
    // Predicated region
    $region14: #{tpu_custom_call.1} parent=1 // pred_check
      _
    $region15: #{tpu_custom_call.1} parent=1 // pred_check_branch
      %119 = sbr.rel (0) target = $region17
    $region16: #{tpu_custom_call.1} parent=1 // pred_region
      %s121 = ssub.s32 128, 64
      %122 = vsyncadd [#allocation5], %s121
      %s123 = sshll.u32 [#allocation6], 4
      %s124 = int_to_ptr.vmem [resolvable:$true] %s123
      %129 = dma.vmem_to_hbm [thread:$0]  %s124, 64, %s2, [#allocation5], 64, 64, 4
    $region17: #{tpu_custom_call.1} parent=1 // pred_fallthru
      _
    // Predicated region
    $region18: #{tpu_custom_call.1} parent=1 // pred_check
      _
    $region19: #{tpu_custom_call.1} parent=1 // pred_check_branch
      %131 = sbr.rel (0) target = $region21
    $region20: #{tpu_custom_call.1} parent=1 // pred_region
      %132 = dma.done [#allocation5], 128
    $region21: #{tpu_custom_call.1} parent=1 // pred_fallthru
      _
    %133 = vsyncpa [#allocation4], 1
    %134 = vsyncpa [#allocation5], 1

</llo_original>
